<compile_context>
chip_gen: v6e
topology: v6e:2x2x1
jax: 0.10.0
libtpu: 0.0.40
codegen_flags: <defaults>
</compile_context>

<pallas_src>
import jax
import jax.numpy as jnp
from jax.experimental import pallas as pl
from jax.experimental.pallas import tpu as pltpu

CONV_K = 5
CONV_C = 3
F_PAD = 256  # conv feature width 180 padded to lane-dense 256


def _round_up(n, m):
    return ((n + m - 1) // m) * m


def dnn_cnn_kernel(x_ref, a_ref, bc_ref, w1_ref, b1_ref, w2_ref, b2_ref, o_ref):
    # x_ref : (TB, L)      f32  (cast to bf16 here; VPU cast hides under MXU/DMA)
    # a_ref : (L, F_PAD)   bf16 banded im2col conv operator (cols 180:256 are zero)
    # bc_ref: (1, F_PAD)   f32  conv bias row (cols 180:256 are zero)
    # w1_ref: (F_PAD, 64)  bf16 (rows 180:256 are zero)
    # b1_ref: (1, 64)      f32
    # w2_ref: (64, OUT)    bf16
    # b2_ref: (1, OUT)     f32
    x = x_ref[...].astype(jnp.bfloat16)

    # Conv1d(1->3, k=5) + ReLU + channel-major flatten as a single MXU matmul.
    # Fused dot + bias + ReLU + bf16 cast so only the bf16 copy of h stays live.
    h = jnp.maximum(
        jnp.dot(x, a_ref[...], preferred_element_type=jnp.float32) + bc_ref[...],
        0.0,
    ).astype(jnp.bfloat16)

    # Dropout(p=0.2) is identity in eval/inference mode.
    # TODO(synk): training-mode dropout (random masking) not implemented.

    # fc1 + ReLU (bf16 MXU, f32 accumulate), fused the same way.
    h1 = jnp.maximum(
        jnp.dot(h, w1_ref[...], preferred_element_type=jnp.float32) + b1_ref[...],
        0.0,
    ).astype(jnp.bfloat16)

    # fc2 + Sigmoid: sigmoid(x) = 1 / (1 + exp(-x)); reciprocal goes to the EUP slot.
    logits = jnp.dot(h1, w2_ref[...], preferred_element_type=jnp.float32) + b2_ref[...]
    o_ref[...] = pl.reciprocal(1.0 + jnp.exp(-logits), approx=True).astype(o_ref.dtype)


def build_conv_operator(conv_w, conv_b, L):
    """Banded im2col matrix A (L, F_PAD) and bias row (1, F_PAD); columns are
    channel-major (matching torch's .view(B, -1) on an NCW conv output), columns
    beyond 3*(L-4)=180 are zero."""
    L_out = L - CONV_K + 1
    F = CONV_C * L_out
    A = jnp.zeros((L, F_PAD), jnp.float32)
    t = jnp.arange(L_out)
    for c in range(CONV_C):
        for k in range(CONV_K):
            A = A.at[t + k, c * L_out + t].set(conv_w[c, k])
    b_vec = jnp.zeros((1, F_PAD), jnp.float32).at[0, :F].set(jnp.repeat(conv_b, L_out))
    return A, b_vec


def _choose_tb(B, tb):
    """Batch tile: big enough to amortize per-step overhead, multiple of 8 (or == B for
    tiny batches), and shrunk so the grid has >= 2 steps when possible (v7x dual TC)."""
    if B <= 8:
        return B                       # single full-array block (legal: block == array dims)
    tb = max(8, (min(tb, B) // 8) * 8)
    if pl.cdiv(B, tb) < 2:
        tb = max(8, _round_up(pl.cdiv(B, 2), 8))
    return tb


def dnn_cnn_forward(x, params, *, tb=8192, vmem_limit_bytes=48 << 20):
    """x: (B, L) f32. Returns (B, out_size) f32.

    tb=8192 amortizes grid-step overhead; live VMEM at TB=8192 is ~20 MiB, safe under the
    48 MiB limit on every generation (v7x has 64 MiB physical). On v5e/v6e larger tb /
    vmem_limit_bytes can be swept upward.
    """
    B, L = x.shape
    L_out = L - CONV_K + 1
    F = CONV_C * L_out                                   # 180
    H = params["w1"].shape[1]                            # 64
    out_size = params["w2"].shape[1]

    # --- host-side one-time prep (weights only; x is fed untouched) ---
    A, b_conv = build_conv_operator(params["conv_w"], params["conv_b"], L)
    A_bf = A.astype(jnp.bfloat16)
    w1_bf = jnp.zeros((F_PAD, H), jnp.float32).at[:F].set(params["w1"]).astype(jnp.bfloat16)
    b1_f32 = params["b1"].reshape(1, H).astype(jnp.float32)
    w2_bf = params["w2"].astype(jnp.bfloat16)
    b2_f32 = params["b2"].reshape(1, out_size).astype(jnp.float32)

    TB = _choose_tb(B, tb)
    grid = (pl.cdiv(B, TB),)   # ragged last tile handled by Pallas partial-block masking

    const = dict(pipeline_mode=pl.Buffered(1))  # grid-invariant operands: single buffer

    flops = 2 * B * (L * F_PAD + F_PAD * H + H * out_size)
    bytes_accessed = (x.size * 4 + A_bf.size * 2 + w1_bf.size * 2 + w2_bf.size * 2
                      + b_conv.size * 4 + b1_f32.size * 4 + b2_f32.size * 4
                      + B * out_size * 4)
    cost = pl.CostEstimate(flops=flops, transcendentals=B * out_size,
                           bytes_accessed=bytes_accessed)

    return pl.pallas_call(
        dnn_cnn_kernel,
        out_shape=jax.ShapeDtypeStruct((B, out_size), jnp.float32),
        grid_spec=pltpu.PrefetchScalarGridSpec(
            num_scalar_prefetch=0,
            grid=grid,
            in_specs=[
                pl.BlockSpec((TB, L), lambda i: (i, 0)),                 # x batch tile (f32)
                pl.BlockSpec((L, F_PAD), lambda i: (0, 0), **const),     # conv im2col matrix
                pl.BlockSpec((1, F_PAD), lambda i: (0, 0), **const),     # conv bias row
                pl.BlockSpec((F_PAD, H), lambda i: (0, 0), **const),     # fc1 weight (padded)
                pl.BlockSpec((1, H), lambda i: (0, 0), **const),         # fc1 bias
                pl.BlockSpec((H, out_size), lambda i: (0, 0), **const),  # fc2 weight (unpadded)
                pl.BlockSpec((1, out_size), lambda i: (0, 0), **const),  # fc2 bias
            ],
            out_specs=pl.BlockSpec((TB, out_size), lambda i: (i, 0)),    # narrow f32 output
        ),
        compiler_params=pltpu.CompilerParams(
            dimension_semantics=("parallel",),      # batch axis shards across v7x's two TCs
            vmem_limit_bytes=vmem_limit_bytes,
        ),
        cost_estimate=cost,
    )(x, A_bf, b_conv, w1_bf, b1_f32, w2_bf, b2_f32)


def init_params(key, input_size=64, output_size=8):
    assert CONV_C * (input_size - CONV_K + 1) == 180, "fc1 expects 180 = 3*(input_size-4)"
    k = jax.random.split(key, 6)

    def u(kk, shape, fan_in):
        bound = 1.0 / jnp.sqrt(jnp.float32(fan_in))
        return jax.random.uniform(kk, shape, jnp.float32, -bound, bound)

    return {
        "conv_w": u(k[0], (CONV_C, CONV_K), 1 * CONV_K),   # (out_ch, k), in_ch=1 squeezed
        "conv_b": u(k[1], (CONV_C,), 1 * CONV_K),
        "w1": u(k[2], (180, 64), 180),                      # stored as (in, out)
        "b1": u(k[3], (1, 64), 180),
        "w2": u(k[4], (64, output_size), 64),
        "b2": u(k[5], (1, output_size), 64),
    }


def reference_forward(x, p):
    # Pure-JAX f32 reference of the eval-mode PyTorch forward.
    B, L = x.shape
    L_out = L - CONV_K + 1
    conv = jnp.stack(
        [sum(p["conv_w"][c, k] * x[:, k:k + L_out] for k in range(CONV_K)) + p["conv_b"][c]
         for c in range(CONV_C)], axis=1)                   # (B, 3, L_out)
    h = jnp.maximum(conv, 0.0).reshape(B, -1)               # (B, 180)
    h1 = jnp.maximum(h @ p["w1"] + p["b1"], 0.0)
    return jax.nn.sigmoid(h1 @ p["w2"] + p["b2"])


if __name__ == "__main__":
    key = jax.random.PRNGKey(0)
    kx, kp = jax.random.split(key)
    input_size, output_size, batch = 64, 8, 2

    x = jax.random.normal(kx, (batch, input_size), jnp.float32)
    params = init_params(kp, input_size=input_size, output_size=output_size)

    out = jax.block_until_ready(dnn_cnn_forward(x, params))

    ref = reference_forward(x, params)
    assert out.shape == (batch, output_size)
    # bf16 matmul operands + approx reciprocal => looser tolerance vs the f32 reference.
    assert jnp.allclose(out, ref, atol=2e-2, rtol=2e-2), "mismatch vs reference"
    print("KERNEL_OK")
</pallas_src>

<mosaic_0001>
module attributes {stable_mosaic.version = 11 : i64} {
  func.func @dnn_cnn_kernel(%arg0: i32, %arg1: memref<2x64xf32, #tpu.memory_space<vmem>>, %arg2: memref<64x256xbf16, #tpu.memory_space<vmem>>, %arg3: memref<1x256xf32, #tpu.memory_space<vmem>>, %arg4: memref<256x64xbf16, #tpu.memory_space<vmem>>, %arg5: memref<1x64xf32, #tpu.memory_space<vmem>>, %arg6: memref<64x8xbf16, #tpu.memory_space<vmem>>, %arg7: memref<1x8xf32, #tpu.memory_space<vmem>>, %arg8: memref<2x8xf32, #tpu.memory_space<vmem>>) attributes {dimension_semantics = [#tpu.dimension_semantics<parallel>], iteration_bounds = array<i64: 1>, scalar_prefetch = 0 : i64, scratch_operands = 0 : i64, tpu.core_type = #tpu.core_type<tc>, window_params = [{transform_indices = @transform_0, window_bounds = array<i64: 2, 64>}, {pipeline_mode = #tpu.pipeline_mode<synchronous>, transform_indices = @transform_1, window_bounds = array<i64: 64, 256>}, {pipeline_mode = #tpu.pipeline_mode<synchronous>, transform_indices = @transform_2, window_bounds = array<i64: 1, 256>}, {pipeline_mode = #tpu.pipeline_mode<synchronous>, transform_indices = @transform_3, window_bounds = array<i64: 256, 64>}, {pipeline_mode = #tpu.pipeline_mode<synchronous>, transform_indices = @transform_4, window_bounds = array<i64: 1, 64>}, {pipeline_mode = #tpu.pipeline_mode<synchronous>, transform_indices = @transform_5, window_bounds = array<i64: 64, 8>}, {pipeline_mode = #tpu.pipeline_mode<synchronous>, transform_indices = @transform_6, window_bounds = array<i64: 1, 8>}, {transform_indices = @transform_7, window_bounds = array<i64: 2, 8>}]} {
    %c0 = arith.constant 0 : index
    %c0_0 = arith.constant 0 : index
    %0 = vector.load %arg1[%c0, %c0_0] : memref<2x64xf32, #tpu.memory_space<vmem>>, vector<2x64xf32>
    %1 = arith.truncf %0 : vector<2x64xf32> to vector<2x64xbf16>
    %c0_1 = arith.constant 0 : index
    %c0_2 = arith.constant 0 : index
    %2 = vector.load %arg2[%c0_1, %c0_2] : memref<64x256xbf16, #tpu.memory_space<vmem>>, vector<64x256xbf16>
    %cst = arith.constant dense<0.000000e+00> : vector<2x256xf32>
    %3 = tpu.matmul %1, %2, %cst {dimension_numbers = #tpu.dot_dimension_numbers<[1], [0], [0], [1], [0, 0, 1, 1], [], []>} : vector<2x64xbf16>, vector<64x256xbf16>, vector<2x256xf32> -> vector<2x256xf32>
    %c0_3 = arith.constant 0 : index
    %c0_4 = arith.constant 0 : index
    %4 = vector.load %arg3[%c0_3, %c0_4] : memref<1x256xf32, #tpu.memory_space<vmem>>, vector<1x256xf32>
    %5 = vector.broadcast %4 : vector<1x256xf32> to vector<2x256xf32>
    %6 = arith.addf %3, %5 : vector<2x256xf32>
    %cst_5 = arith.constant 0.000000e+00 : f32
    %7 = vector.broadcast %cst_5 : f32 to vector<2x256xf32>
    %8 = arith.maximumf %6, %7 : vector<2x256xf32>
    %9 = arith.truncf %8 : vector<2x256xf32> to vector<2x256xbf16>
    %c0_6 = arith.constant 0 : index
    %c0_7 = arith.constant 0 : index
    %10 = vector.load %arg4[%c0_6, %c0_7] : memref<256x64xbf16, #tpu.memory_space<vmem>>, vector<256x64xbf16>
    %cst_8 = arith.constant dense<0.000000e+00> : vector<2x64xf32>
    %11 = tpu.matmul %9, %10, %cst_8 {dimension_numbers = #tpu.dot_dimension_numbers<[1], [0], [0], [1], [0, 0, 1, 1], [], []>} : vector<2x256xbf16>, vector<256x64xbf16>, vector<2x64xf32> -> vector<2x64xf32>
    %c0_9 = arith.constant 0 : index
    %c0_10 = arith.constant 0 : index
    %12 = vector.load %arg5[%c0_9, %c0_10] : memref<1x64xf32, #tpu.memory_space<vmem>>, vector<1x64xf32>
    %13 = vector.broadcast %12 : vector<1x64xf32> to vector<2x64xf32>
    %14 = arith.addf %11, %13 : vector<2x64xf32>
    %cst_11 = arith.constant 0.000000e+00 : f32
    %15 = vector.broadcast %cst_11 : f32 to vector<2x64xf32>
    %16 = arith.maximumf %14, %15 : vector<2x64xf32>
    %17 = arith.truncf %16 : vector<2x64xf32> to vector<2x64xbf16>
    %c0_12 = arith.constant 0 : index
    %c0_13 = arith.constant 0 : index
    %18 = vector.load %arg6[%c0_12, %c0_13] : memref<64x8xbf16, #tpu.memory_space<vmem>>, vector<64x8xbf16>
    %cst_14 = arith.constant dense<0.000000e+00> : vector<2x8xf32>
    %19 = tpu.matmul %17, %18, %cst_14 {dimension_numbers = #tpu.dot_dimension_numbers<[1], [0], [0], [1], [0, 0, 1, 1], [], []>} : vector<2x64xbf16>, vector<64x8xbf16>, vector<2x8xf32> -> vector<2x8xf32>
    %c0_15 = arith.constant 0 : index
    %c0_16 = arith.constant 0 : index
    %20 = vector.load %arg7[%c0_15, %c0_16] : memref<1x8xf32, #tpu.memory_space<vmem>>, vector<1x8xf32>
    %21 = vector.broadcast %20 : vector<1x8xf32> to vector<2x8xf32>
    %22 = arith.addf %19, %21 : vector<2x8xf32>
    %cst_17 = arith.constant 0.000000e+00 : f32
    %23 = vector.broadcast %cst_17 : f32 to vector<2x8xf32>
    %24 = arith.subf %23, %22 : vector<2x8xf32>
    %25 = math.exp %24 : vector<2x8xf32>
    %cst_18 = arith.constant 1.000000e+00 : f32
    %26 = vector.broadcast %cst_18 : f32 to vector<2x8xf32>
    %27 = arith.addf %26, %25 : vector<2x8xf32>
    %28 = tpu.reciprocal %27 {approx = true} : vector<2x8xf32> -> vector<2x8xf32>
    %c0_19 = arith.constant 0 : index
    %c0_20 = arith.constant 0 : index
    %29 = vector.load %arg8[%c0_19, %c0_20] : memref<2x8xf32, #tpu.memory_space<vmem>>, vector<2x8xf32>
    tpu.vector_store %arg8[%c0_19, %c0_20], %28 {strides = array<i32>} : memref<2x8xf32, #tpu.memory_space<vmem>>, vector<2x8xf32>,
    return
  }
  func.func @transform_0(%arg0: i32) -> (i32, i32) {
    %c0_i32 = arith.constant 0 : i32
    %c0_i32_0 = arith.constant 0 : i32
    return %arg0, %c0_i32 : i32, i32
  }
  func.func @transform_1(%arg0: i32) -> (i32, i32) {
    %c0_i32 = arith.constant 0 : i32
    %c0_i32_0 = arith.constant 0 : i32
    %c0_i32_1 = arith.constant 0 : i32
    return %c0_i32, %c0_i32_0 : i32, i32
  }
  func.func @transform_2(%arg0: i32) -> (i32, i32) {
    %c0_i32 = arith.constant 0 : i32
    %c0_i32_0 = arith.constant 0 : i32
    %c0_i32_1 = arith.constant 0 : i32
    return %c0_i32, %c0_i32_0 : i32, i32
  }
  func.func @transform_3(%arg0: i32) -> (i32, i32) {
    %c0_i32 = arith.constant 0 : i32
    %c0_i32_0 = arith.constant 0 : i32
    %c0_i32_1 = arith.constant 0 : i32
    return %c0_i32, %c0_i32_0 : i32, i32
  }
  func.func @transform_4(%arg0: i32) -> (i32, i32) {
    %c0_i32 = arith.constant 0 : i32
    %c0_i32_0 = arith.constant 0 : i32
    %c0_i32_1 = arith.constant 0 : i32
    return %c0_i32, %c0_i32_0 : i32, i32
  }
  func.func @transform_5(%arg0: i32) -> (i32, i32) {
    %c0_i32 = arith.constant 0 : i32
    %c0_i32_0 = arith.constant 0 : i32
    %c0_i32_1 = arith.constant 0 : i32
    return %c0_i32, %c0_i32_0 : i32, i32
  }
  func.func @transform_6(%arg0: i32) -> (i32, i32) {
    %c0_i32 = arith.constant 0 : i32
    %c0_i32_0 = arith.constant 0 : i32
    %c0_i32_1 = arith.constant 0 : i32
    return %c0_i32, %c0_i32_0 : i32, i32
  }
  func.func @transform_7(%arg0: i32) -> (i32, i32) {
    %c0_i32 = arith.constant 0 : i32
    %c0_i32_0 = arith.constant 0 : i32
    return %arg0, %c0_i32 : i32, i32
  }
}

</mosaic_0001>

<llo_original>
// kernel: tpu_custom_call.1
$region0: #{tpu_custom_call.1}
  #allocation0 [shape = 'u32[]', space=smem, size = 0x4, offset = 0x4, fixed_abs, tag = 'smem constant byte address 0x4 - core index']
  #allocation1 [shape = 'u32[144,128]{1,0:T(1,128)}', space=vmem, size = 0x12000, scoped, tag = 'internal scratch']
  %s0 = inlined_call_operand.vmem [shape: f32[2,64], index: 0, kind: input, shape index: {}]
  %s1 = inlined_call_operand.vmem [shape: bf16[64,256], index: 1, kind: input, shape index: {}]
  %s2 = inlined_call_operand.vmem [shape: f32[1,256], index: 2, kind: input, shape index: {}]
  %s3 = inlined_call_operand.vmem [shape: bf16[256,64], index: 3, kind: input, shape index: {}]
  %s4 = inlined_call_operand.vmem [shape: f32[1,64], index: 4, kind: input, shape index: {}]
  %s5 = inlined_call_operand.vmem [shape: bf16[64,8], index: 5, kind: input, shape index: {}]
  %s6 = inlined_call_operand.vmem [shape: f32[1,8], index: 6, kind: input, shape index: {}]
  %s7 = inlined_call_operand.hbm [shape: f32[2,8], index: 7, kind: output, shape index: {}]
  %s8 = sld [smem:[#allocation0]]
  $region38: #{tpu_custom_call.1} parent=0
    _
  %s10 = ssub.s32 1, %s8
  %s11 = scalar_select 0, %s10, %s8
  $region1: #{tpu_custom_call.1} parent=0
    #allocation2 [shape = 'u8[1024]{0}', space=vmem, size = 0x400, scoped, tag = 'output window, operand 0, single buffered']
    #allocation3 [shape = 's32[1]{0}', space=sflag, size = 0x4, scoped, tag = 'scoped memory for tpu_custom_call.1']
    %12 = vsyncpa [#allocation3], 0
    // Predicated region
    $region2: #{tpu_custom_call.1} parent=1 // pred_check
      _
    $region3: #{tpu_custom_call.1} parent=1 // pred_check_branch
      %14 = sbr.rel (0) target = $region5
    $region4: #{tpu_custom_call.1} parent=1 // pred_region
      _
    $region5: #{tpu_custom_call.1} parent=1 // pred_fallthru
      _
    // Predicated region
    $region6: #{tpu_custom_call.1} parent=1 // pred_check
      _
    $region7: #{tpu_custom_call.1} parent=1 // pred_check_branch
      %16 = sbr.rel (0) target = $region9
    $region8: #{tpu_custom_call.1} parent=1 // pred_region
      _
    $region9: #{tpu_custom_call.1} parent=1 // pred_fallthru
      _
    // Predicated region
    $region10: #{tpu_custom_call.1} parent=1 // pred_check
      _
    $region11: #{tpu_custom_call.1} parent=1 // pred_check_branch
      %18 = sbr.rel (0) target = $region13
    $region12: #{tpu_custom_call.1} parent=1 // pred_region
      _
    $region13: #{tpu_custom_call.1} parent=1 // pred_fallthru
      _
    // Predicated region
    $region14: #{tpu_custom_call.1} parent=1 // pred_check
      _
    $region15: #{tpu_custom_call.1} parent=1 // pred_check_branch
      %20 = sbr.rel (0) target = $region17
    $region16: #{tpu_custom_call.1} parent=1 // pred_region
      _
    $region17: #{tpu_custom_call.1} parent=1 // pred_fallthru
      _
    // Predicated region
    $region18: #{tpu_custom_call.1} parent=1 // pred_check
      _
    $region19: #{tpu_custom_call.1} parent=1 // pred_check_branch
      %22 = sbr.rel (0) target = $region21
    $region20: #{tpu_custom_call.1} parent=1 // pred_region
      _
    $region21: #{tpu_custom_call.1} parent=1 // pred_fallthru
      _
    // Predicated region
    $region22: #{tpu_custom_call.1} parent=1 // pred_check
      _
    $region23: #{tpu_custom_call.1} parent=1 // pred_check_branch
      %24 = sbr.rel (0) target = $region25
    $region24: #{tpu_custom_call.1} parent=1 // pred_region
      _
    $region25: #{tpu_custom_call.1} parent=1 // pred_fallthru
      _
    // Predicated region
    $region26: #{tpu_custom_call.1} parent=1 // pred_check
      _
    $region27: #{tpu_custom_call.1} parent=1 // pred_check_branch
      %26 = sbr.rel (0) target = $region29
    $region28: #{tpu_custom_call.1} parent=1 // pred_region
      _
    $region29: #{tpu_custom_call.1} parent=1 // pred_fallthru
      _
    %v28 = vld [vmem:[%s0] sm:$0x3]
    %v29 = vpack.c.bf16 %v28, %v28
    %v30 = vld [vmem:[%s1] sm:$0xff]
    %v31 = vld [vmem:[%s1 + $0x8] sm:$0xff]
    %v32 = vld [vmem:[%s1 + $0x10] sm:$0xff]
    %v33 = vld [vmem:[%s1 + $0x18] sm:$0xff]
    %v34 = vld [vmem:[%s1 + $0x20] sm:$0xff]
    %v35 = vld [vmem:[%s1 + $0x28] sm:$0xff]
    %v36 = vld [vmem:[%s1 + $0x30] sm:$0xff]
    %v37 = vld [vmem:[%s1 + $0x38] sm:$0xff]
    %v38 = vld [vmem:[%s2] sm:$0x3]
    %v40 = vlaneseq
    %v41 = vshrl.u32 %v40, 7
    %v42 = vsub.s32 0, %v41
    %v43 = vrot.slane %v38, %v42
    %v44 = vlaneseq
    %v45 = vshrl.u32 %v44, 7
    %v46 = vsub.s32 1, %v45
    %v47 = vrot.slane %v38, %v46
    %v58 = vunpack.c.l.b16 %v30
    %v59 = vunpack.c.h.b16 %v30
    %v60 = vunpack.c.l.b16 %v31
    %v61 = vunpack.c.h.b16 %v31
    %v62 = vunpack.c.l.b16 %v32
    %v63 = vunpack.c.h.b16 %v32
    %v64 = vunpack.c.l.b16 %v33
    %v65 = vunpack.c.h.b16 %v33
    %v66 = vunpack.c.l.b16 %v34
    %v67 = vunpack.c.h.b16 %v34
    %v68 = vunpack.c.l.b16 %v35
    %v69 = vunpack.c.h.b16 %v35
    %v70 = vunpack.c.l.b16 %v36
    %v71 = vunpack.c.h.b16 %v36
    %v72 = vunpack.c.l.b16 %v37
    %v73 = vunpack.c.h.b16 %v37
    %v74 = vpack.c.b16 %v60, %v58
    %v75 = vpack.c.b16 %v61, %v59
    %v76 = vpack.c.b16 %v64, %v62
    %v77 = vpack.c.b16 %v65, %v63
    %v78 = vpack.c.b16 %v68, %v66
    %v79 = vpack.c.b16 %v69, %v67
    %v80 = vpack.c.b16 %v72, %v70
    %v81 = vpack.c.b16 %v73, %v71
    %vm90 = vcmask 523264
    %v92 = vsel %vm90, %v29, 0
    %94 = vmatprep.subr.bf16.mxu0 0
    %95 = vmatpush1.bf16.msra.mxu0 0
    %96 = vmatprep.subr.bf16.mxu0 0
    %97 = vmatpush1.bf16.msra.mxu0 0
    %98 = vmatprep.subr.bf16.mxu0 0
    %99 = vmatpush1.bf16.msra.mxu0 0
    %100 = vmatprep.subr.bf16.mxu0 0
    %101 = vmatpush1.bf16.msra.mxu0 0
    %102 = vmatprep.subr.bf16.mxu0 %v81
    %103 = vmatpush1.bf16.msra.mxu0 %v80
    %104 = vmatprep.subr.bf16.mxu0 %v79
    %105 = vmatpush1.bf16.msra.mxu0 %v78
    %106 = vmatprep.subr.bf16.mxu0 %v77
    %107 = vmatpush1.bf16.msra.mxu0 %v76
    %108 = vmatprep.subr.bf16.mxu0 %v75
    %109 = vmatpush1.bf16.msra.mxu0 %v74
    %110 = vmatprep.subr.bf16.mxu0 0
    %111 = vmatpush2.bf16.msra.mxu0 0
    %112 = vmatprep.subr.bf16.mxu0 0
    %113 = vmatpush2.bf16.msra.mxu0 0
    %114 = vmatprep.subr.bf16.mxu0 0
    %115 = vmatpush2.bf16.msra.mxu0 0
    %116 = vmatprep.subr.bf16.mxu0 0
    %117 = vmatpush2.bf16.msra.mxu0 0
    %118 = vmatprep.subr.bf16.mxu0 0
    %119 = vmatpush2.bf16.msra.mxu0 0
    %120 = vmatprep.subr.bf16.mxu0 0
    %121 = vmatpush2.bf16.msra.mxu0 0
    %122 = vmatprep.subr.bf16.mxu0 0
    %123 = vmatpush2.bf16.msra.mxu0 0
    %124 = vmatprep.subr.bf16.mxu0 0
    %125 = vmatpush2.bf16.msra.mxu0 0
    %126 = vmatprep.mubr.bf16.mxu0 0
    %127 = vmatmul.mubr.bf16.gmra.mxu0 %v92
    %v128 = vpop.f32.mrf.mxu0
    %v129 = vadd.f32 %v43, %v128
    %v130 = vpop.f32.mrf.mxu0
    %v131 = vadd.f32 %v47, %v130
    %v132 = vpop.f32.mrf.mxu0
    %v133 = vpop.f32.mrf.mxu0
    %134 = vdwg.mxu0
    %v135 = vmax.f32 %v129, 0.0
    %v136 = vmax.f32 %v131, 0.0
    %v137 = vpack.c.bf16 %v135, %v135
    %v138 = vpack.c.bf16 %v136, %v136
    %v139 = vld [vmem:[%s3] sm:$0xf]
    %v140 = vld [vmem:[%s3 + $0x4] sm:$0xf]
    %v141 = vld [vmem:[%s3 + $0x8] sm:$0xf]
    %v142 = vld [vmem:[%s3 + $0xc] sm:$0xf]
    %v143 = vld [vmem:[%s3 + $0x10] sm:$0xf]
    %v144 = vld [vmem:[%s3 + $0x14] sm:$0xf]
    %v145 = vld [vmem:[%s3 + $0x18] sm:$0xf]
    %v146 = vld [vmem:[%s3 + $0x1c] sm:$0xf]
    %v147 = vld [vmem:[%s3 + $0x20] sm:$0xf]
    %v148 = vld [vmem:[%s3 + $0x24] sm:$0xf]
    %v149 = vld [vmem:[%s3 + $0x28] sm:$0xf]
    %v150 = vld [vmem:[%s3 + $0x2c] sm:$0xf]
    %v151 = vld [vmem:[%s3 + $0x30] sm:$0xf]
    %v152 = vld [vmem:[%s3 + $0x34] sm:$0xf]
    %v153 = vld [vmem:[%s3 + $0x38] sm:$0xf]
    %v154 = vld [vmem:[%s3 + $0x3c] sm:$0xf]
    %v155 = vld [vmem:[%s3 + $0x40] sm:$0xf]
    %v156 = vld [vmem:[%s3 + $0x44] sm:$0xf]
    %v157 = vld [vmem:[%s3 + $0x48] sm:$0xf]
    %v158 = vld [vmem:[%s3 + $0x4c] sm:$0xf]
    %v159 = vld [vmem:[%s3 + $0x50] sm:$0xf]
    %v160 = vld [vmem:[%s3 + $0x54] sm:$0xf]
    %v161 = vld [vmem:[%s3 + $0x58] sm:$0xf]
    %v162 = vld [vmem:[%s3 + $0x5c] sm:$0xf]
    %v163 = vld [vmem:[%s3 + $0x60] sm:$0xf]
    %v164 = vld [vmem:[%s3 + $0x64] sm:$0xf]
    %v165 = vld [vmem:[%s3 + $0x68] sm:$0xf]
    %v166 = vld [vmem:[%s3 + $0x6c] sm:$0xf]
    %v167 = vld [vmem:[%s3 + $0x70] sm:$0xf]
    %v168 = vld [vmem:[%s3 + $0x74] sm:$0xf]
    %v169 = vld [vmem:[%s3 + $0x78] sm:$0xf]
    %v170 = vld [vmem:[%s3 + $0x7c] sm:$0xf]
    %v171 = vld [vmem:[%s4] sm:$0x1]
    %v173 = vlaneseq
    %v174 = vshrl.u32 %v173, 7
    %v175 = vsub.s32 0, %v174
    %v176 = vrot.slane %v171, %v175
    %v210 = vunpack.c.l.b16 %v139
    %v211 = vunpack.c.l.b16 %v140
    %v212 = vunpack.c.l.b16 %v141
    %v213 = vunpack.c.l.b16 %v142
    %v214 = vunpack.c.l.b16 %v143
    %v215 = vunpack.c.l.b16 %v144
    %v216 = vunpack.c.l.b16 %v145
    %v217 = vunpack.c.l.b16 %v146
    %v218 = vunpack.c.l.b16 %v147
    %v219 = vunpack.c.l.b16 %v148
    %v220 = vunpack.c.l.b16 %v149
    %v221 = vunpack.c.l.b16 %v150
    %v222 = vunpack.c.l.b16 %v151
    %v223 = vunpack.c.l.b16 %v152
    %v224 = vunpack.c.l.b16 %v153
    %v225 = vunpack.c.l.b16 %v154
    %v226 = vunpack.c.l.b16 %v155
    %v227 = vunpack.c.l.b16 %v156
    %v228 = vunpack.c.l.b16 %v157
    %v229 = vunpack.c.l.b16 %v158
    %v230 = vunpack.c.l.b16 %v159
    %v231 = vunpack.c.l.b16 %v160
    %v232 = vunpack.c.l.b16 %v161
    %v233 = vunpack.c.l.b16 %v162
    %v234 = vunpack.c.l.b16 %v163
    %v235 = vunpack.c.l.b16 %v164
    %v236 = vunpack.c.l.b16 %v165
    %v237 = vunpack.c.l.b16 %v166
    %v238 = vunpack.c.l.b16 %v167
    %v239 = vunpack.c.l.b16 %v168
    %v240 = vunpack.c.l.b16 %v169
    %v241 = vunpack.c.l.b16 %v170
    %v242 = vpack.c.b16 %v211, %v210
    %v243 = vpack.c.b16 %v213, %v212
    %v244 = vpack.c.b16 %v215, %v214
    %v245 = vpack.c.b16 %v217, %v216
    %v246 = vpack.c.b16 %v219, %v218
    %v247 = vpack.c.b16 %v221, %v220
    %v248 = vpack.c.b16 %v223, %v222
    %v249 = vpack.c.b16 %v225, %v224
    %v250 = vpack.c.b16 %v227, %v226
    %v251 = vpack.c.b16 %v229, %v228
    %v252 = vpack.c.b16 %v231, %v230
    %v253 = vpack.c.b16 %v233, %v232
    %v254 = vpack.c.b16 %v235, %v234
    %v255 = vpack.c.b16 %v237, %v236
    %v256 = vpack.c.b16 %v239, %v238
    %v257 = vpack.c.b16 %v241, %v240
    %274 = vmatprep.subr.bf16.mxu0 0
    %275 = vmatpush1.bf16.msra.mxu0 %v249
    %276 = vmatprep.subr.bf16.mxu0 0
    %277 = vmatpush1.bf16.msra.mxu0 %v248
    %278 = vmatprep.subr.bf16.mxu0 0
    %279 = vmatpush1.bf16.msra.mxu0 %v247
    %280 = vmatprep.subr.bf16.mxu0 0
    %281 = vmatpush1.bf16.msra.mxu0 %v246
    %282 = vmatprep.subr.bf16.mxu0 0
    %283 = vmatpush1.bf16.msra.mxu0 %v245
    %284 = vmatprep.subr.bf16.mxu0 0
    %285 = vmatpush1.bf16.msra.mxu0 %v244
    %286 = vmatprep.subr.bf16.mxu0 0
    %287 = vmatpush1.bf16.msra.mxu0 %v243
    %288 = vmatprep.subr.bf16.mxu0 0
    %289 = vmatpush1.bf16.msra.mxu0 %v242
    %290 = vmatprep.subr.bf16.mxu0 0
    %291 = vmatpush2.bf16.msra.mxu0 %v257
    %292 = vmatprep.subr.bf16.mxu0 0
    %293 = vmatpush2.bf16.msra.mxu0 %v256
    %294 = vmatprep.subr.bf16.mxu0 0
    %295 = vmatpush2.bf16.msra.mxu0 %v255
    %296 = vmatprep.subr.bf16.mxu0 0
    %297 = vmatpush2.bf16.msra.mxu0 %v254
    %298 = vmatprep.subr.bf16.mxu0 0
    %299 = vmatpush2.bf16.msra.mxu0 %v253
    %300 = vmatprep.subr.bf16.mxu0 0
    %301 = vmatpush2.bf16.msra.mxu0 %v252
    %302 = vmatprep.subr.bf16.mxu0 0
    %303 = vmatpush2.bf16.msra.mxu0 %v251
    %304 = vmatprep.subr.bf16.mxu0 0
    %305 = vmatpush2.bf16.msra.mxu0 %v250
    %306 = vmatprep.mubr.bf16.mxu0 %v138
    %307 = vmatmul.mubr.bf16.gmra.mxu0 %v137
    %v308 = vpop.f32.mrf.mxu0
    %v309 = vadd.f32 %v176, %v308
    %v310 = vpop.f32.mrf.mxu0
    %v311 = vpop.f32.mrf.mxu0
    %v312 = vpop.f32.mrf.mxu0
    %313 = vdwg.mxu0
    %v314 = vmax.f32 %v309, 0.0
    %v315 = vpack.c.bf16 %v314, %v314
    %v316 = vld [vmem:[%s5] sm:$0xf]
    %v317 = vld [vmem:[%s5 + $0x4] sm:$0xf]
    %v318 = vld [vmem:[%s5 + $0x8] sm:$0xf]
    %v319 = vld [vmem:[%s5 + $0xc] sm:$0xf]
    %v320 = vld [vmem:[%s5 + $0x10] sm:$0xf]
    %v321 = vld [vmem:[%s5 + $0x14] sm:$0xf]
    %v322 = vld [vmem:[%s5 + $0x18] sm:$0xf]
    %v323 = vld [vmem:[%s5 + $0x1c] sm:$0xf]
    %v324 = vld [vmem:[%s6] sm:$0x1]
    %v326 = vlaneseq
    %v327 = vshrl.u32 %v326, 7
    %v328 = vsub.s32 0, %v327
    %v329 = vrot.slane %v324, %v328
    %v339 = vunpack.c.l.b16 %v316
    %v340 = vunpack.c.l.b16 %v317
    %v341 = vunpack.c.l.b16 %v318
    %v342 = vunpack.c.l.b16 %v319
    %v343 = vunpack.c.l.b16 %v320
    %v344 = vunpack.c.l.b16 %v321
    %v345 = vunpack.c.l.b16 %v322
    %v346 = vunpack.c.l.b16 %v323
    %v347 = vpack.c.b16 %v340, %v339
    %v348 = vpack.c.b16 %v342, %v341
    %v349 = vpack.c.b16 %v344, %v343
    %v350 = vpack.c.b16 %v346, %v345
    %v356 = vsel %vm90, %v315, 0
    %358 = vmatprep.subr.bf16.mxu0 0
    %359 = vmatpush1.bf16.msra.mxu0 0
    %360 = vmatprep.subr.bf16.mxu0 0
    %361 = vmatpush1.bf16.msra.mxu0 0
    %362 = vmatprep.subr.bf16.mxu0 0
    %363 = vmatpush1.bf16.msra.mxu0 0
    %364 = vmatprep.subr.bf16.mxu0 0
    %365 = vmatpush1.bf16.msra.mxu0 0
    %366 = vmatprep.subr.bf16.mxu0 0
    %367 = vmatpush1.bf16.msra.mxu0 %v350
    %368 = vmatprep.subr.bf16.mxu0 0
    %369 = vmatpush1.bf16.msra.mxu0 %v349
    %370 = vmatprep.subr.bf16.mxu0 0
    %371 = vmatpush1.bf16.msra.mxu0 %v348
    %372 = vmatprep.subr.bf16.mxu0 0
    %373 = vmatpush1.bf16.msra.mxu0 %v347
    %374 = vmatprep.subr.bf16.mxu0 0
    %375 = vmatpush2.bf16.msra.mxu0 0
    %376 = vmatprep.subr.bf16.mxu0 0
    %377 = vmatpush2.bf16.msra.mxu0 0
    %378 = vmatprep.subr.bf16.mxu0 0
    %379 = vmatpush2.bf16.msra.mxu0 0
    %380 = vmatprep.subr.bf16.mxu0 0
    %381 = vmatpush2.bf16.msra.mxu0 0
    %382 = vmatprep.subr.bf16.mxu0 0
    %383 = vmatpush2.bf16.msra.mxu0 0
    %384 = vmatprep.subr.bf16.mxu0 0
    %385 = vmatpush2.bf16.msra.mxu0 0
    %386 = vmatprep.subr.bf16.mxu0 0
    %387 = vmatpush2.bf16.msra.mxu0 0
    %388 = vmatprep.subr.bf16.mxu0 0
    %389 = vmatpush2.bf16.msra.mxu0 0
    %390 = vmatprep.mubr.bf16.mxu0 0
    %391 = vmatmul.mubr.bf16.gmra.mxu0 %v356
    %v392 = vpop.f32.mrf.mxu0
    %v393 = vadd.f32 %v329, %v392
    %v394 = vpop.f32.mrf.mxu0
    %v395 = vpop.f32.mrf.mxu0
    %v396 = vpop.f32.mrf.mxu0
    %397 = vdwg.mxu0
    %v398 = vsub.f32 0.0, %v393
    %v399 = vmul.f32 %v398, 1.442695
    %v400 = vpow.pop %v399
    %v401 = vadd.f32 %v400, 1.0
    %v402 = vrcp.pop %v401
    %vm403 = vcmask 58368
    %404 = vst.msk [vmem:[#allocation2] sm:$0x3] %vm403, %v402
    // Predicated region
    $region30: #{tpu_custom_call.1} parent=1 // pred_check
      _
    $region31: #{tpu_custom_call.1} parent=1 // pred_check_branch
      %406 = sbr.rel (0) target = $region33
    $region32: #{tpu_custom_call.1} parent=1 // pred_region
      %s408 = ssub.s32 32, 32
      %409 = vsyncadd [#allocation3], %s408
      %s411 = sshll.u32 [#allocation2], 4
      %s412 = int_to_ptr.vmem [resolvable:$true] %s411
      %414 = dma.vmem_to_hbm [thread:$0]  %s412, 32, %s7, [#allocation3]
    $region33: #{tpu_custom_call.1} parent=1 // pred_fallthru
      _
    // Predicated region
    $region34: #{tpu_custom_call.1} parent=1 // pred_check
      _
    $region35: #{tpu_custom_call.1} parent=1 // pred_check_branch
      %416 = sbr.rel (0) target = $region37
    $region36: #{tpu_custom_call.1} parent=1 // pred_region
      %417 = dma.done [#allocation3], 32
    $region37: #{tpu_custom_call.1} parent=1 // pred_fallthru
      _
    %418 = vsyncpa [#allocation3], 1

</llo_original>
